<compile_context>
chip_gen: v5e
topology: v5e:2x2
jax: 0.10.0
libtpu: 0.0.40
codegen_flags: <defaults>
</compile_context>

<pallas_src>
from functools import partial

import jax
import jax.numpy as jnp
from jax.experimental import pallas as pl
from jax.experimental.pallas import tpu as pltpu

# ---- module hyper-parameters (small, power-of-2 per-head dim) ----
D_MODEL = 32
N_LEVELS = 1
N_HEADS = 4
N_POINTS = 4
D_HEAD = D_MODEL // N_HEADS


# --------------------------------------------------------------------------
# Pallas linear kernel:  y = x @ w + b   (row-gridded, lane-dense output)
# --------------------------------------------------------------------------
def _linear_kernel(x_ref, w_ref, b_ref, o_ref):
    o_ref[...] = (
        jnp.dot(x_ref[...], w_ref[...], preferred_element_type=jnp.float32)
        + b_ref[...]
    ).astype(o_ref.dtype)


def pallas_linear(x, w, b, block_rows=256):
    """x: (B, K), w: (K, O), b: (O,) -> (B, O). Rows are tiled so the kernel
    pipelines when B grows to realistic sizes; weights are fetched once."""
    B, K = x.shape
    O = w.shape[1]
    bm = B if B <= block_rows else block_rows
    return pl.pallas_call(
        _linear_kernel,
        out_shape=jax.ShapeDtypeStruct((B, O), x.dtype),
        grid=(pl.cdiv(B, bm),),
        in_specs=[
            pl.BlockSpec((bm, K), lambda i: (i, 0)),
            pl.BlockSpec((K, O), lambda i: (0, 0)),
            pl.BlockSpec((1, O), lambda i: (0, 0)),
        ],
        out_specs=pl.BlockSpec((bm, O), lambda i: (i, 0)),
        compiler_params=pltpu.CompilerParams(dimension_semantics=("parallel",)),
    )(x, w, b.reshape(1, O))


# --------------------------------------------------------------------------
# Fused deformable-attention core kernel (per batch; all heads in one block)
#   value_proj + mask -> softmax -> bilinear gather as matmul -> output_proj
# --------------------------------------------------------------------------
def _deform_core_kernel(x_ref, mask_ref, loc_ref, logit_ref,
                        vw_ref, vb_ref, ow_ref, ob_ref,
                        out_ref, attn_ref,
                        *, temporal_lens, level_starts, n_heads, n_points,
                        d_head):
    Lq = loc_ref.shape[1]
    P = n_points
    D = d_head

    # ---- fused value projection + padding mask ----
    x = x_ref[0]                                                   # (S, C)
    v = jnp.dot(x, vw_ref[...], preferred_element_type=jnp.float32) + vb_ref[...]
    v = jnp.where(mask_ref[0] > 0.0, 0.0, v)                       # (S, H*D)

    loc = loc_ref[0]                                               # (Lq, H, L*P)
    logits = logit_ref[0]                                          # (Lq, H, L*P)

    # ---- softmax over (levels * points) per (query, head) ----
    m = jnp.max(logits, axis=-1, keepdims=True)
    e = jnp.exp(logits - m)
    attn = e * pl.reciprocal(jnp.sum(e, axis=-1, keepdims=True), approx=True)
    attn_ref[0] = attn.astype(attn_ref.dtype)

    # ---- deform gather + weighted sum + fused output projection ----
    # grid_sample(mode='bilinear', padding_mode='zeros', align_corners=False)
    # on a 1 x T map: x_pix = loc * T - 0.5 (y is fixed at row 0, weight 1).
    head_acc = [jnp.zeros((Lq, D), jnp.float32) for _ in range(n_heads)]
    for lid, (T, start) in enumerate(zip(temporal_lens, level_starts)):
        # hoisted out of the head loop (JAX does not CSE broadcast_in_dim)
        t_idx = jax.lax.broadcasted_iota(jnp.int32, (Lq, T), 1)   # (Lq, T)
        v_l = v[start:start + T, :]                               # (T, H*D)
        sl = slice(lid * P, (lid + 1) * P)

        for h in range(n_heads):
            loc_l = loc[:, h, sl]                                  # (Lq, P)
            attn_l = attn[:, h, sl]                                # (Lq, P)

            xq = loc_l * T - 0.5
            x0f = jnp.floor(xq)
            wx = xq - x0f
            x0 = x0f.astype(jnp.int32)                             # exact (integral)

            # fold attention weights BEFORE broadcasting to T
            a0 = (1.0 - wx) * attn_l                               # (Lq, P)
            a1 = wx * attn_l                                       # (Lq, P)

            # one-hot taps accumulated per point on a clean 2-D (Lq, T)
            # layout; out-of-range taps match nothing -> zero padding.
            Wc = jnp.zeros((Lq, T), jnp.float32)
            for p in range(P):
                x0p = x0[:, p:p + 1]                               # (Lq, 1)
                Wc = (Wc
                      + jnp.where(t_idx == x0p, a0[:, p:p + 1], 0.0)
                      + jnp.where(t_idx == x0p + 1, a1[:, p:p + 1], 0.0))

            # weighted gather as an MXU matmul against this level/head slab
            head_acc[h] = head_acc[h] + jnp.dot(
                Wc, v_l[:, h * D:(h + 1) * D],
                preferred_element_type=jnp.float32)

    # single full-depth output projection (head-major feature order matches
    # the PyTorch view(N, M*D, Lq) layout)
    gathered = jnp.concatenate(head_acc, axis=1)                   # (Lq, H*D)
    out = jnp.dot(gathered, ow_ref[...], preferred_element_type=jnp.float32)
    out_ref[0] = (out + ob_ref[...]).astype(out_ref.dtype)


def pallas_deform_core(x_val, mask, loc_x, attn_logits, params,
                       temporal_lens, level_starts):
    N, S, C = x_val.shape
    Lq, H, LP = loc_x.shape[1], loc_x.shape[2], loc_x.shape[3]
    kernel = partial(_deform_core_kernel,
                     temporal_lens=tuple(temporal_lens),
                     level_starts=tuple(level_starts),
                     n_heads=N_HEADS, n_points=N_POINTS, d_head=D_HEAD)
    out, attn = pl.pallas_call(
        kernel,
        out_shape=(jax.ShapeDtypeStruct((N, Lq, C), jnp.float32),
                   jax.ShapeDtypeStruct((N, Lq, H, LP), jnp.float32)),
        grid=(N,),
        in_specs=[
            pl.BlockSpec((1, S, C), lambda n: (n, 0, 0)),            # src slab
            pl.BlockSpec((1, S, 1), lambda n: (n, 0, 0)),            # pad mask
            pl.BlockSpec((1, Lq, H, LP), lambda n: (n, 0, 0, 0)),    # loc x
            pl.BlockSpec((1, Lq, H, LP), lambda n: (n, 0, 0, 0)),    # attn logits
            pl.BlockSpec((C, C), lambda n: (0, 0)),                  # value_w
            pl.BlockSpec((1, C), lambda n: (0, 0)),                  # value_b
            pl.BlockSpec((C, C), lambda n: (0, 0)),                  # out_w
            pl.BlockSpec((1, C), lambda n: (0, 0)),                  # out_b
        ],
        out_specs=(pl.BlockSpec((1, Lq, C), lambda n: (n, 0, 0)),
                   pl.BlockSpec((1, Lq, H, LP), lambda n: (n, 0, 0, 0))),
        compiler_params=pltpu.CompilerParams(
            dimension_semantics=("parallel",)),
    )(x_val, mask, loc_x, attn_logits,
      params["value_w"], params["value_b"].reshape(1, C),
      params["out_w"], params["out_b"].reshape(1, C))
    return out, attn


# --------------------------------------------------------------------------
# Parameter init (mirrors DeformAttn._reset_parameters, deterministic)
# --------------------------------------------------------------------------
def init_params(key):
    k1, k2 = jax.random.split(key)
    a = (6.0 / (D_MODEL + D_MODEL)) ** 0.5  # xavier_uniform bound
    params = {
        # stored as (in, out) so y = x @ w + b
        "value_w": jax.random.uniform(k1, (D_MODEL, D_MODEL), jnp.float32, -a, a),
        "value_b": jnp.zeros((D_MODEL,), jnp.float32),
        "out_w": jax.random.uniform(k2, (D_MODEL, D_MODEL), jnp.float32, -a, a),
        "out_b": jnp.zeros((D_MODEL,), jnp.float32),
        "off_w": jnp.zeros((D_MODEL, N_HEADS * N_LEVELS * N_POINTS), jnp.float32),
        "attn_w": jnp.zeros((D_MODEL, N_HEADS * N_LEVELS * N_POINTS), jnp.float32),
        "attn_b": jnp.zeros((N_HEADS * N_LEVELS * N_POINTS,), jnp.float32),
    }
    # sampling_offsets bias = grid_init (see _reset_parameters)
    g = jnp.linspace(-float(N_POINTS), float(N_POINTS), N_HEADS * N_POINTS + 1)
    mid = N_HEADS * N_POINTS // 2
    g = jnp.concatenate([g[:mid], g[mid + 1:]])                     # (H*P,)
    g = jnp.tile(g.reshape(N_HEADS, 1, N_POINTS, 1), (1, N_LEVELS, 1, 1))
    params["off_b"] = g.reshape(-1).astype(jnp.float32)             # (H*L*P,)
    return params


# --------------------------------------------------------------------------
# DeformAttn.forward
# --------------------------------------------------------------------------
def deform_attn_forward(params, query, reference_points, input_flatten,
                        input_temporal_lens, input_level_start_index,
                        input_padding_mask=None):
    N, Len_q, C = query.shape
    L, H, P = N_LEVELS, N_HEADS, N_POINTS
    HLP = H * L * P

    # temporal lens must be static (they define per-level value slab shapes)
    lens = [int(t) for t in input_temporal_lens[:L]]
    starts = [0]
    for T in lens[:-1]:
        starts.append(starts[-1] + T)
    Len_values = sum(lens)

    # ---- fused sampling_offsets + attention_weights projection (1 matmul) ----
    q2 = query.reshape(N * Len_q, C)
    fused_w = jnp.concatenate([params["off_w"], params["attn_w"]], axis=1)
    fused_b = jnp.concatenate([params["off_b"], params["attn_b"]], axis=0)
    qproj = pallas_linear(q2, fused_w, fused_b)                     # (N*Lq, 2*HLP)
    sampling_offsets = qproj[:, :HLP].reshape(N, Len_q, H, L, P, 1)
    attn_logits = qproj[:, HLP:].reshape(N, Len_q, H, L * P)        # natural layout

    # ---- sampling locations ----
    tl = jnp.asarray(input_temporal_lens[:L], jnp.float32)
    if reference_points.shape[-1] == 1:
        offset_normalizer = tl[:, None]                             # (L, 1)
        sampling_locations = (
            reference_points[:, :, None, :L, None, :]
            + sampling_offsets / offset_normalizer[None, None, None, :, None, :]
        )
    elif reference_points.shape[-1] == 2:
        sampling_locations = (
            reference_points[:, :, None, :L, None, :1]
            + sampling_offsets / (P * H // 2)
            * reference_points[:, :, None, :L, None, 1:]
        )
    else:
        raise ValueError("reference_points last dim must be 1 or 2")
    sampling_locations_full = jnp.concatenate(
        [sampling_locations, jnp.full_like(sampling_locations, 0.5)], axis=-1)

    # natural layouts (no transposes): contiguous reshapes only
    loc_x = sampling_locations[..., 0].reshape(N, Len_q, H, L * P)

    if input_padding_mask is not None:
        mask = input_padding_mask[:, :Len_values].astype(jnp.float32)
        mask = mask.reshape(N, Len_values, 1)
    else:
        mask = jnp.zeros((N, Len_values, 1), jnp.float32)

    # ---- fused core: value_proj + mask + deform attention + output_proj ----
    output, attn_sm = pallas_deform_core(
        input_flatten[:, :Len_values], mask, loc_x, attn_logits,
        params, lens, starts)

    attention_weights = attn_sm.reshape(N, Len_q, H, L, P)
    return output, (sampling_locations_full, attention_weights)


# --------------------------------------------------------------------------
if __name__ == "__main__":
    key = jax.random.PRNGKey(0)
    kp, kq, kr, kf = jax.random.split(key, 4)

    params = init_params(kp)

    N, Len_q = 2, 8
    temporal_lens = jnp.array([16], jnp.int32)          # n_levels = 1
    level_start_index = jnp.array([0], jnp.int32)
    Len_in = int(temporal_lens.sum())

    query = jax.random.normal(kq, (N, Len_q, D_MODEL), jnp.float32)
    reference_points = jax.random.uniform(kr, (N, Len_q, N_LEVELS, 1), jnp.float32)
    input_flatten = jax.random.normal(kf, (N, Len_in, D_MODEL), jnp.float32)
    input_padding_mask = jnp.zeros((N, Len_in), bool).at[:, -2:].set(True)

    out, (locs, attn) = deform_attn_forward(
        params, query, reference_points, input_flatten,
        temporal_lens, level_start_index, input_padding_mask)

    jax.block_until_ready(out)
    assert out.shape == (N, Len_q, D_MODEL)
    assert locs.shape == (N, Len_q, N_HEADS, N_LEVELS, N_POINTS, 2)
    assert attn.shape == (N, Len_q, N_HEADS, N_LEVELS, N_POINTS)
    print("KERNEL_OK")
</pallas_src>

<mosaic_0001>
module attributes {stable_mosaic.version = 11 : i64} {
  func.func @_linear_kernel(%arg0: i32, %arg1: memref<16x32xf32, #tpu.memory_space<vmem>>, %arg2: memref<32x32xf32, #tpu.memory_space<vmem>>, %arg3: memref<1x32xf32, #tpu.memory_space<vmem>>, %arg4: memref<16x32xf32, #tpu.memory_space<vmem>>) attributes {dimension_semantics = [#tpu.dimension_semantics<parallel>], iteration_bounds = array<i64: 1>, scalar_prefetch = 0 : i64, scratch_operands = 0 : i64, tpu.core_type = #tpu.core_type<tc>, window_params = [{transform_indices = @transform_0, window_bounds = array<i64: 16, 32>}, {pipeline_mode = #tpu.pipeline_mode<synchronous>, transform_indices = @transform_1, window_bounds = array<i64: 32, 32>}, {pipeline_mode = #tpu.pipeline_mode<synchronous>, transform_indices = @transform_2, window_bounds = array<i64: 1, 32>}, {transform_indices = @transform_3, window_bounds = array<i64: 16, 32>}]} {
    %c0 = arith.constant 0 : index
    %c0_0 = arith.constant 0 : index
    %0 = vector.load %arg1[%c0, %c0_0] : memref<16x32xf32, #tpu.memory_space<vmem>>, vector<16x32xf32>
    %c0_1 = arith.constant 0 : index
    %c0_2 = arith.constant 0 : index
    %1 = vector.load %arg2[%c0_1, %c0_2] : memref<32x32xf32, #tpu.memory_space<vmem>>, vector<32x32xf32>
    %cst = arith.constant dense<0.000000e+00> : vector<16x32xf32>
    %2 = tpu.matmul %0, %1, %cst {dimension_numbers = #tpu.dot_dimension_numbers<[1], [0], [0], [1], [0, 0, 1, 1], [], []>} : vector<16x32xf32>, vector<32x32xf32>, vector<16x32xf32> -> vector<16x32xf32>
    %c0_3 = arith.constant 0 : index
    %c0_4 = arith.constant 0 : index
    %3 = vector.load %arg3[%c0_3, %c0_4] : memref<1x32xf32, #tpu.memory_space<vmem>>, vector<1x32xf32>
    %4 = vector.broadcast %3 : vector<1x32xf32> to vector<16x32xf32>
    %5 = arith.addf %2, %4 : vector<16x32xf32>
    %c0_5 = arith.constant 0 : index
    %c0_6 = arith.constant 0 : index
    %6 = vector.load %arg4[%c0_5, %c0_6] : memref<16x32xf32, #tpu.memory_space<vmem>>, vector<16x32xf32>
    tpu.vector_store %arg4[%c0_5, %c0_6], %5 {strides = array<i32>} : memref<16x32xf32, #tpu.memory_space<vmem>>, vector<16x32xf32>,
    return
  }
  func.func @transform_0(%arg0: i32) -> (i32, i32) {
    %c0_i32 = arith.constant 0 : i32
    %c0_i32_0 = arith.constant 0 : i32
    return %arg0, %c0_i32 : i32, i32
  }
  func.func @transform_1(%arg0: i32) -> (i32, i32) {
    %c0_i32 = arith.constant 0 : i32
    %c0_i32_0 = arith.constant 0 : i32
    %c0_i32_1 = arith.constant 0 : i32
    return %c0_i32, %c0_i32_0 : i32, i32
  }
  func.func @transform_2(%arg0: i32) -> (i32, i32) {
    %c0_i32 = arith.constant 0 : i32
    %c0_i32_0 = arith.constant 0 : i32
    %c0_i32_1 = arith.constant 0 : i32
    return %c0_i32, %c0_i32_0 : i32, i32
  }
  func.func @transform_3(%arg0: i32) -> (i32, i32) {
    %c0_i32 = arith.constant 0 : i32
    %c0_i32_0 = arith.constant 0 : i32
    return %arg0, %c0_i32 : i32, i32
  }
}

</mosaic_0001>

<llo_original>
// kernel: tpu_custom_call.1
$region0: #{tpu_custom_call.1}
  #allocation0 [shape = 'u32[]', space=smem, size = 0x4, offset = 0x4, fixed_abs, tag = 'smem constant byte address 0x4 - core index']
  #allocation1 [shape = 'u32[72,128]{1,0:T(1,128)}', space=vmem, size = 0x9000, scoped, tag = 'internal scratch']
  %s0 = inlined_call_operand.hbm [shape: f32[16,32], index: 0, kind: input, shape index: {}]
  %s1 = inlined_call_operand.hbm [shape: f32[32,32], index: 1, kind: input, shape index: {}]
  %s2 = inlined_call_operand.vmem [shape: f32[1,32], index: 2, kind: input, shape index: {}]
  %s3 = inlined_call_operand.hbm [shape: f32[16,32], index: 3, kind: output, shape index: {}]
  %s4 = sld [smem:[#allocation0]]
  $region30: #{tpu_custom_call.1} parent=0
    _
  %s6 = ssub.s32 1, %s4
  %s7 = scalar_select 0, %s6, %s4
  $region1: #{tpu_custom_call.1} parent=0
    #allocation2 [shape = 'u8[8192]{0}', space=vmem, size = 0x2000, scoped, tag = 'input window, operand 0, single buffered']
    #allocation3 [shape = 's32[1]{0}', space=sflag, size = 0x4, scoped, tag = 'scoped memory for tpu_custom_call.1']
    #allocation4 [shape = 's32[1]{0}', space=sflag, size = 0x4, scoped, tag = 'scoped memory for tpu_custom_call.1']
    #allocation5 [shape = 'u8[16384]{0}', space=vmem, size = 0x4000, scoped, tag = 'input window, operand 1, single buffered']
    #allocation6 [shape = 's32[1]{0}', space=sflag, size = 0x4, scoped, tag = 'scoped memory for tpu_custom_call.1']
    #allocation7 [shape = 'u8[8192]{0}', space=vmem, size = 0x2000, scoped, tag = 'output window, operand 0, single buffered']
    %8 = vsyncpa [#allocation3], 0
    %9 = vsyncpa [#allocation6], 0
    %10 = vsyncpa [#allocation4], 0
    // Predicated region
    $region2: #{tpu_custom_call.1} parent=1 // pred_check
      _
    $region3: #{tpu_custom_call.1} parent=1 // pred_check_branch
      %12 = sbr.rel (0) target = $region5
    $region4: #{tpu_custom_call.1} parent=1 // pred_region
      %14 = vsyncadd [#allocation3], 0
      %s15 = sshll.u32 %s0, 4
      %s16 = int_to_ptr.hbm [resolvable:$true] %s15
      %s17 = sshll.u32 [#allocation2], 4
      %s18 = int_to_ptr.vmem [resolvable:$true] %s17
      %23 = dma.hbm_to_vmem [thread:$0]  %s16, 256, %s18, [#allocation3], 128, 128, 8
    $region5: #{tpu_custom_call.1} parent=1 // pred_fallthru
      _
    // Predicated region
    $region6: #{tpu_custom_call.1} parent=1 // pred_check
      _
    $region7: #{tpu_custom_call.1} parent=1 // pred_check_branch
      %25 = sbr.rel (0) target = $region9
    $region8: #{tpu_custom_call.1} parent=1 // pred_region
      %27 = vsyncadd [#allocation6], 0
      %s28 = sshll.u32 %s1, 4
      %s29 = int_to_ptr.hbm [resolvable:$true] %s28
      %s30 = sshll.u32 [#allocation5], 4
      %s31 = int_to_ptr.vmem [resolvable:$true] %s30
      %36 = dma.hbm_to_vmem [thread:$0]  %s29, 512, %s31, [#allocation6], 128, 128, 8
    $region9: #{tpu_custom_call.1} parent=1 // pred_fallthru
      _
    // Predicated region
    $region10: #{tpu_custom_call.1} parent=1 // pred_check
      _
    $region11: #{tpu_custom_call.1} parent=1 // pred_check_branch
      %38 = sbr.rel (0) target = $region13
    $region12: #{tpu_custom_call.1} parent=1 // pred_region
      _
    $region13: #{tpu_custom_call.1} parent=1 // pred_fallthru
      _
    // Predicated region
    $region14: #{tpu_custom_call.1} parent=1 // pred_check
      _
    $region15: #{tpu_custom_call.1} parent=1 // pred_check_branch
      %40 = sbr.rel (0) target = $region17
    $region16: #{tpu_custom_call.1} parent=1 // pred_region
      %42 = dma.done [#allocation3], 256
    $region17: #{tpu_custom_call.1} parent=1 // pred_fallthru
      _
    // Predicated region
    $region18: #{tpu_custom_call.1} parent=1 // pred_check
      _
    $region19: #{tpu_custom_call.1} parent=1 // pred_check_branch
      %44 = sbr.rel (0) target = $region21
    $region20: #{tpu_custom_call.1} parent=1 // pred_region
      %46 = dma.done [#allocation6], 512
    $region21: #{tpu_custom_call.1} parent=1 // pred_fallthru
      _
    %v47 = vld [vmem:[#allocation2] sm:$0xff]
    %v48 = vld [vmem:[#allocation2 + $0x8] sm:$0xff]
    %v49 = vld [vmem:[#allocation5] sm:$0xff]
    %v50 = vld [vmem:[#allocation5 + $0x8] sm:$0xff]
    %v51 = vld [vmem:[#allocation5 + $0x10] sm:$0xff]
    %v52 = vld [vmem:[#allocation5 + $0x18] sm:$0xff]
    %v53 = vld [vmem:[%s2] sm:$0x1]
    %v55 = vperm.slane %v53, 0
    %vm57 = vcmask 261120
    %v59 = vsel %vm57, %v47, 0
    %v62 = vsel %vm57, %v48, 0
    %64 = vmatpush.msra.mxu0 0.0
    %65 = vmatpush.msra.mxu0 0.0
    %66 = vmatpush.msra.mxu0 0.0
    %67 = vmatpush.msra.mxu0 0.0
    %68 = vmatpush.msra.mxu0 0.0
    %69 = vmatpush.msra.mxu0 0.0
    %70 = vmatpush.msra.mxu0 0.0
    %71 = vmatpush.msra.mxu0 0.0
    %72 = vmatpush.msra.mxu0 0.0
    %73 = vmatpush.msra.mxu0 0.0
    %74 = vmatpush.msra.mxu0 0.0
    %75 = vmatpush.msra.mxu0 0.0
    %76 = vmatpush.msra.mxu0 %v52
    %77 = vmatpush.msra.mxu0 %v51
    %78 = vmatpush.msra.mxu0 %v50
    %79 = vmatpush.msra.mxu0 %v49
    %80 = vmatmul.f32.gmra.mxu0 %v59
    %v81 = vpop.f32.mrf.mxu0
    %v82 = vadd.f32 %v55, %v81
    %83 = vmatmul.f32.gmra.mxu0 %v62
    %v84 = vpop.f32.mrf.mxu0
    %v85 = vadd.f32 %v55, %v84
    %86 = vdwg.mxu0
    %87 = vst.msk [vmem:[#allocation7] sm:$0xff] %vm57, %v82
    %88 = vst.msk [vmem:[#allocation7 + $0x8] sm:$0xff] %vm57, %v85
    // Predicated region
    $region22: #{tpu_custom_call.1} parent=1 // pred_check
      _
    $region23: #{tpu_custom_call.1} parent=1 // pred_check_branch
      %90 = sbr.rel (0) target = $region25
    $region24: #{tpu_custom_call.1} parent=1 // pred_region
      %92 = vsyncadd [#allocation4], 0
      %s93 = sshll.u32 [#allocation7], 4
      %s94 = int_to_ptr.vmem [resolvable:$true] %s93
      %s95 = sshll.u32 %s3, 4
      %s96 = int_to_ptr.hbm [resolvable:$true] %s95
      %101 = dma.vmem_to_hbm [thread:$0]  %s94, 256, %s96, [#allocation4], 128, 128, 8
    $region25: #{tpu_custom_call.1} parent=1 // pred_fallthru
      _
    // Predicated region
    $region26: #{tpu_custom_call.1} parent=1 // pred_check
      _
    $region27: #{tpu_custom_call.1} parent=1 // pred_check_branch
      %103 = sbr.rel (0) target = $region29
    $region28: #{tpu_custom_call.1} parent=1 // pred_region
      %105 = dma.done [#allocation4], 256
    $region29: #{tpu_custom_call.1} parent=1 // pred_fallthru
      _
    %106 = vsyncpa [#allocation3], 1
    %107 = vsyncpa [#allocation6], 1
    %108 = vsyncpa [#allocation4], 1

</llo_original>
